<compile_context>
chip_gen: v7x
topology: tpu7x:2x2x1
jax: 0.10.0
libtpu: 0.0.40
codegen_flags: <defaults>
</compile_context>

<pallas_src>
import functools

import jax
import jax.numpy as jnp
from jax.experimental import pallas as pl
from jax.experimental.pallas import tpu as pltpu


NUM_CLASSES = 5


# --------------------------- hardware-aware config ---------------------------

@functools.lru_cache(maxsize=None)
def _vmem_limit_bytes() -> int:
    """Scoped-VMEM budget: ~half of physical VMEM (64 MiB on v5e/v6e, 32 MiB on v7x)."""
    cap = 64 * 1024 * 1024  # conservative default (v7x per-TC physical VMEM)
    try:
        info = pltpu.get_tpu_info()
        cap = int(getattr(info, "vmem_capacity_bytes", cap))
    except Exception:
        pass
    return int(min(cap // 2, 96 * 1024 * 1024))


def _pick_tile_b(B: int, D: int) -> int:
    """Largest batch tile (divisor of B, multiple of 8) whose f32 x-tile fits the
    per-tile VMEM budget, preferring >=4 (else >=2) grid steps so the batch axis
    can be sharded across v7x's two TensorCores and DMA/compute stay pipelined."""
    per_tile_budget = _vmem_limit_bytes() // 4   # x is double-buffered + headroom
    bytes_per_row = D * 4                        # x stays f32 in HBM
    candidates = [t for t in (2048, 1024, 512, 256, 128, 64, 32, 16, 8)
                  if B % t == 0 and t * bytes_per_row <= per_tile_budget]
    for min_steps in (4, 2, 1):
        for t in candidates:               # descending: biggest tile that still
            if B // t >= min_steps:        # leaves >= min_steps grid steps
                return t
    if B % 8 == 0:
        return 8
    # TODO(synk): ragged / enormous batches would need padding + in-kernel masking.
    return B


# ---------------- single-buffering capability probe (resident operands) ------

_BUFFERED1_OK = None


def _probe_copy_kernel(a_ref, o_ref):
    o_ref[...] = a_ref[...]


def _single_buffer_supported() -> bool:
    """Probe once whether pipeline_mode=pl.Buffered(1) is accepted on a
    top-level pallas_call BlockSpec; otherwise fall back to default buffering."""
    global _BUFFERED1_OK
    if _BUFFERED1_OK is None:
        try:
            fn = pl.pallas_call(
                _probe_copy_kernel,
                out_shape=jax.ShapeDtypeStruct((8, 128), jnp.float32),
                grid=(1,),
                in_specs=[pl.BlockSpec((8, 128), lambda i: (0, 0),
                                       pipeline_mode=pl.Buffered(1))],
                out_specs=pl.BlockSpec((8, 128), lambda i: (0, 0)),
            )
            jax.block_until_ready(fn(jnp.zeros((8, 128), jnp.float32)))
            _BUFFERED1_OK = True
        except Exception:
            _BUFFERED1_OK = False
    return _BUFFERED1_OK


def _resident_spec(block_shape):
    """BlockSpec for a VMEM-resident operand (constant index map). Single-buffered
    when supported: it is fetched once, so a second buffer is pure VMEM waste."""
    if _BUFFERED1_OK:
        return pl.BlockSpec(block_shape, lambda i: (0, 0), pipeline_mode=pl.Buffered(1))
    return pl.BlockSpec(block_shape, lambda i: (0, 0))


# ------------------------------- Pallas kernels ------------------------------

def linear_kernel(x_ref, wt_ref, b_ref, o_ref):
    # logits = x @ W^T + b ; f32 x streamed from HBM, cast to bf16 in-VPU (free
    # under a mem-bound roofline), f32 accumulation on the MXU.
    xb = x_ref[...].astype(jnp.bfloat16)
    logits = jnp.dot(xb, wt_ref[...], preferred_element_type=jnp.float32)
    o_ref[...] = (logits + b_ref[...]).astype(o_ref.dtype)


def linear_ce_kernel(x_ref, wt_ref, b_ref, y_ref, nll_ref):
    # Fused linear + per-row negative log-likelihood (mean finalized in the
    # wrapper with the TRUE batch size, so tiling never corrupts the mean).
    xb = x_ref[...].astype(jnp.bfloat16)
    logits = jnp.dot(xb, wt_ref[...], preferred_element_type=jnp.float32)
    logits = logits + b_ref[...]                                          # (TB, C) f32
    m = jnp.max(logits, axis=-1, keepdims=True)                           # (TB, 1)
    lse = jnp.log(jnp.sum(jnp.exp(logits - m), axis=-1, keepdims=True))   # (TB, 1)
    tb, c = logits.shape
    class_ids = jax.lax.broadcasted_iota(jnp.int32, (tb, c), dimension=1)
    onehot = (class_ids == y_ref[...]).astype(jnp.float32)                # y_ref: (TB, 1)
    logit_y = jnp.sum(logits * onehot, axis=-1, keepdims=True)            # (TB, 1)
    # -log_softmax(logits)[y] = m + lse - logit_y   (log_probs never materialized)
    # TODO(synk): a per-tile partial-sum output would shrink the lane-1 writeback
    # further, but a (1,1) output block violates the (8,128) sublane constraint
    # and a resident accumulator would force the grid axis to "arbitrary"
    # (losing the v7x core split); this (B,1) writeback is only x_bytes/D anyway.
    nll_ref[...] = m + lse - logit_y


# ------------------------------ jitted call paths ----------------------------

@jax.jit
def _forward_logits(x, wt_bf16, bias2d):
    B, D = x.shape
    C = wt_bf16.shape[1]
    tile_b = _pick_tile_b(B, D)
    grid = (B // tile_b,)
    cparams = pltpu.CompilerParams(
        dimension_semantics=("parallel",),          # shard batch axis across TCs
        vmem_limit_bytes=_vmem_limit_bytes(),
    )
    cost = pl.CostEstimate(
        flops=2 * B * D * C,
        transcendentals=0,
        bytes_accessed=B * D * 4 + D * C * 2 + C * 4 + B * C * 4,
    )
    return pl.pallas_call(
        linear_kernel,
        out_shape=jax.ShapeDtypeStruct((B, C), jnp.float32),
        grid=grid,
        in_specs=[
            pl.BlockSpec((tile_b, D), lambda i: (i, 0)),   # x tile (f32, streamed)
            _resident_spec((D, C)),                        # W^T, VMEM-resident
            _resident_spec((1, C)),                        # bias, VMEM-resident
        ],
        out_specs=pl.BlockSpec((tile_b, C), lambda i: (i, 0)),
        compiler_params=cparams,
        cost_estimate=cost,
    )(x, wt_bf16, bias2d)


@jax.jit
def _ce_loss(x, y, wt_bf16, bias2d):
    B, D = x.shape
    C = wt_bf16.shape[1]
    tile_b = _pick_tile_b(B, D)
    grid = (B // tile_b,)
    y2 = y.astype(jnp.int32).reshape(B, 1)
    cparams = pltpu.CompilerParams(
        dimension_semantics=("parallel",),
        vmem_limit_bytes=_vmem_limit_bytes(),
    )
    cost = pl.CostEstimate(
        flops=2 * B * D * C + 6 * B * C,
        transcendentals=B * C + B,
        bytes_accessed=B * D * 4 + D * C * 2 + C * 4 + B * 4 + B * 4,
    )
    nll = pl.pallas_call(
        linear_ce_kernel,
        out_shape=jax.ShapeDtypeStruct((B, 1), jnp.float32),
        grid=grid,
        in_specs=[
            pl.BlockSpec((tile_b, D), lambda i: (i, 0)),   # x tile
            _resident_spec((D, C)),                        # W^T
            _resident_spec((1, C)),                        # bias
            pl.BlockSpec((tile_b, 1), lambda i: (i, 0)),   # labels tile
        ],
        out_specs=pl.BlockSpec((tile_b, 1), lambda i: (i, 0)),
        compiler_params=cparams,
        cost_estimate=cost,
    )(x, wt_bf16, bias2d, y2)
    # jit fuses this (B,1) -> scalar mean with the kernel's writeback.
    return jnp.sum(nll) / jnp.float32(B)


# ------------------------------- Python wrapper -------------------------------

class PallasTorchModel:
    """Pallas port of TorchModel: Linear(input_size, 5) + cross_entropy."""

    NUM_CLASSES = NUM_CLASSES

    def __init__(self, input_size: int, key=None):
        if key is None:
            key = jax.random.PRNGKey(42)
        kw, kb = jax.random.split(key)
        bound = 1.0 / jnp.sqrt(jnp.float32(input_size))
        # PyTorch-style params (f32, kept for reference / training semantics).
        self.weight = jax.random.uniform(
            kw, (self.NUM_CLASSES, input_size), jnp.float32, -bound, bound)
        self.bias = jax.random.uniform(
            kb, (self.NUM_CLASSES,), jnp.float32, -bound, bound)
        # Kernel operands, prepared once: transposed bf16 weight + (1, C) f32 bias.
        self.wt_bf16 = jnp.asarray(self.weight.T, dtype=jnp.bfloat16)   # (D, C)
        self.bias2d = self.bias.reshape(1, self.NUM_CLASSES)            # (1, C)
        # One-time (eager) capability probe so jitted traces see a fixed answer.
        _single_buffer_supported()

    def __call__(self, x, y=None):
        if y is None:
            return _forward_logits(x, self.wt_bf16, self.bias2d)
        return _ce_loss(x, y, self.wt_bf16, self.bias2d)


# ------------------------------------ main ------------------------------------

if __name__ == "__main__":
    input_size = 32
    batch = 8

    key = jax.random.PRNGKey(0)
    kx, ky, kp = jax.random.split(key, 3)
    x = jax.random.normal(kx, (batch, input_size), jnp.float32)
    y = jax.random.randint(ky, (batch,), 0, 5, jnp.int32)

    model = PallasTorchModel(input_size, key=kp)

    # inference path: y_pred = linear(x)
    y_pred = model(x)
    jax.block_until_ready(y_pred)

    # training path: scalar cross-entropy loss
    loss = model(x, y)
    jax.block_until_ready(loss)

    # Reference matching the kernel's numerics (bf16 MXU operands, f32 accumulation).
    x_q = x.astype(jnp.bfloat16).astype(jnp.float32)
    w_q = model.wt_bf16.astype(jnp.float32)
    ref_logits = x_q @ w_q + model.bias
    ref_logp = jax.nn.log_softmax(ref_logits, axis=-1)
    ref_loss = -jnp.mean(ref_logp[jnp.arange(batch), y])
    assert jnp.allclose(y_pred, ref_logits, atol=1e-4, rtol=1e-4)
    assert jnp.allclose(loss, ref_loss, atol=1e-4, rtol=1e-4)

    # Coarse check against the full-f32 PyTorch-equivalent reference.
    f32_logits = x @ model.weight.T + model.bias
    f32_logp = jax.nn.log_softmax(f32_logits, axis=-1)
    f32_loss = -jnp.mean(f32_logp[jnp.arange(batch), y])
    assert jnp.allclose(y_pred, f32_logits, atol=5e-2, rtol=5e-2)
    assert jnp.allclose(loss, f32_loss, atol=5e-2, rtol=5e-2)

    print("KERNEL_OK")
</pallas_src>

<mosaic_0001>
module attributes {stable_mosaic.version = 11 : i64} {
  func.func @_probe_copy_kernel(%arg0: i32, %arg1: memref<8x128xf32, #tpu.memory_space<vmem>>, %arg2: memref<8x128xf32, #tpu.memory_space<vmem>>) attributes {dimension_semantics = [#tpu.dimension_semantics<arbitrary>], iteration_bounds = array<i64: 1>, scalar_prefetch = 0 : i64, scratch_operands = 0 : i64, tpu.core_type = #tpu.core_type<tc>, window_params = [{pipeline_mode = #tpu.pipeline_mode<synchronous>, transform_indices = @transform_0, window_bounds = array<i64: 8, 128>}, {pipeline_mode = #tpu.pipeline_mode<synchronous>, transform_indices = @transform_1, window_bounds = array<i64: 8, 128>}]} {
    %c0 = arith.constant 0 : index
    %c0_0 = arith.constant 0 : index
    %0 = vector.load %arg1[%c0, %c0_0] : memref<8x128xf32, #tpu.memory_space<vmem>>, vector<8x128xf32>
    %c0_1 = arith.constant 0 : index
    %c0_2 = arith.constant 0 : index
    %1 = vector.load %arg2[%c0_1, %c0_2] : memref<8x128xf32, #tpu.memory_space<vmem>>, vector<8x128xf32>
    tpu.vector_store %arg2[%c0_1, %c0_2], %0 {strides = array<i32>} : memref<8x128xf32, #tpu.memory_space<vmem>>, vector<8x128xf32>,
    return
  }
  func.func @transform_0(%arg0: i32) -> (i32, i32) {
    %c0_i32 = arith.constant 0 : i32
    %c0_i32_0 = arith.constant 0 : i32
    %c0_i32_1 = arith.constant 0 : i32
    return %c0_i32, %c0_i32_0 : i32, i32
  }
  func.func @transform_1(%arg0: i32) -> (i32, i32) {
    %c0_i32 = arith.constant 0 : i32
    %c0_i32_0 = arith.constant 0 : i32
    %c0_i32_1 = arith.constant 0 : i32
    return %c0_i32, %c0_i32_0 : i32, i32
  }
}

module attributes {stable_mosaic.version = 11 : i64} {
  func.func @linear_kernel(%arg0: i32, %arg1: memref<8x32xf32, #tpu.memory_space<vmem>>, %arg2: memref<32x5xbf16, #tpu.memory_space<vmem>>, %arg3: memref<1x5xf32, #tpu.memory_space<vmem>>, %arg4: memref<8x5xf32, #tpu.memory_space<vmem>>) attributes {dimension_semantics = [#tpu.dimension_semantics<parallel>], iteration_bounds = array<i64: 1>, scalar_prefetch = 0 : i64, scratch_operands = 0 : i64, tpu.core_type = #tpu.core_type<tc>, window_params = [{transform_indices = @transform_0, window_bounds = array<i64: 8, 32>}, {pipeline_mode = #tpu.pipeline_mode<synchronous>, transform_indices = @transform_1, window_bounds = array<i64: 32, 5>}, {pipeline_mode = #tpu.pipeline_mode<synchronous>, transform_indices = @transform_2, window_bounds = array<i64: 1, 5>}, {transform_indices = @transform_3, window_bounds = array<i64: 8, 5>}]} {
    %c0 = arith.constant 0 : index
    %c0_0 = arith.constant 0 : index
    %0 = vector.load %arg1[%c0, %c0_0] : memref<8x32xf32, #tpu.memory_space<vmem>>, vector<8x32xf32>
    %1 = arith.truncf %0 : vector<8x32xf32> to vector<8x32xbf16>
    %c0_1 = arith.constant 0 : index
    %c0_2 = arith.constant 0 : index
    %2 = vector.load %arg2[%c0_1, %c0_2] : memref<32x5xbf16, #tpu.memory_space<vmem>>, vector<32x5xbf16>
    %cst = arith.constant dense<0.000000e+00> : vector<8x5xf32>
    %3 = tpu.matmul %1, %2, %cst {dimension_numbers = #tpu.dot_dimension_numbers<[1], [0], [0], [1], [0, 0, 1, 1], [], []>} : vector<8x32xbf16>, vector<32x5xbf16>, vector<8x5xf32> -> vector<8x5xf32>
    %c0_3 = arith.constant 0 : index
    %c0_4 = arith.constant 0 : index
    %4 = vector.load %arg3[%c0_3, %c0_4] : memref<1x5xf32, #tpu.memory_space<vmem>>, vector<1x5xf32>
    %5 = vector.broadcast %4 : vector<1x5xf32> to vector<8x5xf32>
    %6 = arith.addf %3, %5 : vector<8x5xf32>
    %c0_5 = arith.constant 0 : index
    %c0_6 = arith.constant 0 : index
    %7 = vector.load %arg4[%c0_5, %c0_6] : memref<8x5xf32, #tpu.memory_space<vmem>>, vector<8x5xf32>
    tpu.vector_store %arg4[%c0_5, %c0_6], %6 {strides = array<i32>} : memref<8x5xf32, #tpu.memory_space<vmem>>, vector<8x5xf32>,
    return
  }
  func.func @transform_0(%arg0: i32) -> (i32, i32) {
    %c0_i32 = arith.constant 0 : i32
    %c0_i32_0 = arith.constant 0 : i32
    return %arg0, %c0_i32 : i32, i32
  }
  func.func @transform_1(%arg0: i32) -> (i32, i32) {
    %c0_i32 = arith.constant 0 : i32
    %c0_i32_0 = arith.constant 0 : i32
    %c0_i32_1 = arith.constant 0 : i32
    return %c0_i32, %c0_i32_0 : i32, i32
  }
  func.func @transform_2(%arg0: i32) -> (i32, i32) {
    %c0_i32 = arith.constant 0 : i32
    %c0_i32_0 = arith.constant 0 : i32
    %c0_i32_1 = arith.constant 0 : i32
    return %c0_i32, %c0_i32_0 : i32, i32
  }
  func.func @transform_3(%arg0: i32) -> (i32, i32) {
    %c0_i32 = arith.constant 0 : i32
    %c0_i32_0 = arith.constant 0 : i32
    return %arg0, %c0_i32 : i32, i32
  }
}

</mosaic_0001>

<llo_original>
// kernel: tpu_custom_call.1
$region0: #{tpu_custom_call.1}
  #allocation0 [shape = 'u32[]', space=smem, size = 0x4, offset = 0x4, fixed_abs, tag = 'smem constant byte address 0x4 - core index']
  #allocation1 [shape = 'u32[144,128]{1,0:T(1,128)}', space=vmem, size = 0x12000, scoped, tag = 'internal scratch']
  %s0 = inlined_call_operand.hbm [shape: f32[8,128], index: 0, kind: input, shape index: {}]
  %s1 = inlined_call_operand.hbm [shape: f32[8,128], index: 1, kind: output, shape index: {}]
  %s2 = sld [smem:[#allocation0]]
  $region18: #{tpu_custom_call.1} parent=0
    _
  %s4 = ssub.s32 1, %s2
  %s5 = scalar_select 0, %s4, %s2
  $region1: #{tpu_custom_call.1} parent=0
    #allocation2 [shape = 'u8[4096]{0}', space=vmem, size = 0x1000, scoped, tag = 'input window, operand 0, single buffered']
    #allocation3 [shape = 's32[1]{0}', space=sflag, size = 0x4, scoped, tag = 'scoped memory for tpu_custom_call.1']
    #allocation4 [shape = 's32[1]{0}', space=sflag, size = 0x4, scoped, tag = 'scoped memory for tpu_custom_call.1']
    #allocation5 [shape = 'u8[4096]{0}', space=vmem, size = 0x1000, scoped, tag = 'output window, operand 0, single buffered']
    %6 = vsyncpa [#allocation3], 0
    %7 = vsyncpa [#allocation4], 0
    // Predicated region
    $region2: #{tpu_custom_call.1} parent=1 // pred_check
      _
    $region3: #{tpu_custom_call.1} parent=1 // pred_check_branch
      %9 = sbr.rel (0) target = $region5
    $region4: #{tpu_custom_call.1} parent=1 // pred_region
      %s11 = ssub.s32 128, 128
      %12 = vsyncadd [#allocation3], %s11
      %s14 = sshll.u32 [#allocation2], 4
      %s15 = int_to_ptr.vmem [resolvable:$true] %s14
      %17 = dma.hbm_to_vmem [thread:$0]  %s0, 128, %s15, [#allocation3]
    $region5: #{tpu_custom_call.1} parent=1 // pred_fallthru
      _
    // Predicated region
    $region6: #{tpu_custom_call.1} parent=1 // pred_check
      _
    $region7: #{tpu_custom_call.1} parent=1 // pred_check_branch
      %19 = sbr.rel (0) target = $region9
    $region8: #{tpu_custom_call.1} parent=1 // pred_region
      %20 = dma.done [#allocation3], 128
    $region9: #{tpu_custom_call.1} parent=1 // pred_fallthru
      _
    %v21 = vld [vmem:[#allocation2] sm:$0xff]
    %22 = vst [vmem:[#allocation5] sm:$0xff] %v21
    // Predicated region
    $region10: #{tpu_custom_call.1} parent=1 // pred_check
      _
    $region11: #{tpu_custom_call.1} parent=1 // pred_check_branch
      %24 = sbr.rel (0) target = $region13
    $region12: #{tpu_custom_call.1} parent=1 // pred_region
      %s26 = ssub.s32 128, 128
      %27 = vsyncadd [#allocation4], %s26
      %s29 = sshll.u32 [#allocation5], 4
      %s30 = int_to_ptr.vmem [resolvable:$true] %s29
      %32 = dma.vmem_to_hbm [thread:$0]  %s30, 128, %s1, [#allocation4]
    $region13: #{tpu_custom_call.1} parent=1 // pred_fallthru
      _
    // Predicated region
    $region14: #{tpu_custom_call.1} parent=1 // pred_check
      _
    $region15: #{tpu_custom_call.1} parent=1 // pred_check_branch
      %34 = sbr.rel (0) target = $region17
    $region16: #{tpu_custom_call.1} parent=1 // pred_region
      %35 = dma.done [#allocation4], 128
    $region17: #{tpu_custom_call.1} parent=1 // pred_fallthru
      _
    %36 = vsyncpa [#allocation3], 1
    %37 = vsyncpa [#allocation4], 1

// kernel: _forward_logits.1
$region0: #{_forward_logits.1}
  #allocation0 [shape = 'u32[]', space=smem, size = 0x4, offset = 0x4, fixed_abs, tag = 'smem constant byte address 0x4 - core index']
  #allocation1 [shape = 'u32[144,128]{1,0:T(1,128)}', space=vmem, size = 0x12000, scoped, tag = 'internal scratch']
  %s0 = inlined_call_operand.vmem [shape: f32[8,32], index: 0, kind: input, shape index: {}]
  %s1 = inlined_call_operand.vmem [shape: bf16[32,5], index: 1, kind: input, shape index: {}]
  %s2 = inlined_call_operand.vmem [shape: f32[1,5], index: 2, kind: input, shape index: {}]
  %s3 = inlined_call_operand.hbm [shape: f32[8,5], index: 3, kind: output, shape index: {}]
  %s4 = sld [smem:[#allocation0]]
  $region22: #{_forward_logits.1} parent=0
    _
  %s6 = ssub.s32 1, %s4
  %s7 = scalar_select 0, %s6, %s4
  $region1: #{_forward_logits.1} parent=0
    #allocation2 [shape = 'u8[4096]{0}', space=vmem, size = 0x1000, scoped, tag = 'output window, operand 0, single buffered']
    #allocation3 [shape = 's32[1]{0}', space=sflag, size = 0x4, scoped, tag = 'scoped memory for _forward_logits.1']
    %8 = vsyncpa [#allocation3], 0
    // Predicated region
    $region2: #{_forward_logits.1} parent=1 // pred_check
      _
    $region3: #{_forward_logits.1} parent=1 // pred_check_branch
      %10 = sbr.rel (0) target = $region5
    $region4: #{_forward_logits.1} parent=1 // pred_region
      _
    $region5: #{_forward_logits.1} parent=1 // pred_fallthru
      _
    // Predicated region
    $region6: #{_forward_logits.1} parent=1 // pred_check
      _
    $region7: #{_forward_logits.1} parent=1 // pred_check_branch
      %12 = sbr.rel (0) target = $region9
    $region8: #{_forward_logits.1} parent=1 // pred_region
      _
    $region9: #{_forward_logits.1} parent=1 // pred_fallthru
      _
    // Predicated region
    $region10: #{_forward_logits.1} parent=1 // pred_check
      _
    $region11: #{_forward_logits.1} parent=1 // pred_check_branch
      %14 = sbr.rel (0) target = $region13
    $region12: #{_forward_logits.1} parent=1 // pred_region
      _
    $region13: #{_forward_logits.1} parent=1 // pred_fallthru
      _
    %v16 = vld [vmem:[%s0] sm:$0xff]
    %v17 = vpack.c.bf16 %v16, %v16
    %v18 = vld [vmem:[%s1] sm:$0xf]
    %v19 = vld [vmem:[%s1 + $0x4] sm:$0xf]
    %v20 = vld [vmem:[%s1 + $0x8] sm:$0xf]
    %v21 = vld [vmem:[%s1 + $0xc] sm:$0xf]
    %v22 = vld [vmem:[%s2] sm:$0x1]
    %v24 = vlaneseq
    %v25 = vshrl.u32 %v24, 7
    %v26 = vsub.s32 0, %v25
    %v27 = vrot.slane %v22, %v26
    %v33 = vunpack.c.l.b16 %v18
    %v34 = vunpack.c.l.b16 %v19
    %v35 = vunpack.c.l.b16 %v20
    %v36 = vunpack.c.l.b16 %v21
    %v37 = vpack.c.b16 %v34, %v33
    %v38 = vpack.c.b16 %v36, %v35
    %vm41 = vcmask 261120
    %v43 = vsel %vm41, %v17, 0
    %45 = vmatprep.subr.bf16.mxu0 0
    %46 = vmatpush1.bf16.msra.mxu0 %v37
    %47 = vmatprep.subr.bf16.mxu0 0
    %48 = vmatpush1.bf16.msra.mxu0 %v38
    %49 = vmatprep.subr.bf16.mxu0 0
    %50 = vmatpush1.bf16.msra.mxu0 0
    %51 = vmatprep.subr.bf16.mxu0 0
    %52 = vmatpush1.bf16.msra.mxu0 0
    %53 = vmatprep.subr.bf16.mxu0 0
    %54 = vmatpush1.bf16.msra.mxu0 0
    %55 = vmatprep.subr.bf16.mxu0 0
    %56 = vmatpush1.bf16.msra.mxu0 0
    %57 = vmatprep.subr.bf16.mxu0 0
    %58 = vmatpush1.bf16.msra.mxu0 0
    %59 = vmatprep.subr.bf16.mxu0 0
    %60 = vmatpush1.bf16.msra.mxu0 0
    %61 = vmatprep.subr.bf16.mxu0 0
    %62 = vmatpush1.bf16.msra.mxu0 0
    %63 = vmatprep.subr.bf16.mxu0 0
    %64 = vmatpush1.bf16.msra.mxu0 0
    %65 = vmatprep.subr.bf16.mxu0 0
    %66 = vmatpush1.bf16.msra.mxu0 0
    %67 = vmatprep.subr.bf16.mxu0 0
    %68 = vmatpush1.bf16.msra.mxu0 0
    %69 = vmatprep.subr.bf16.mxu0 0
    %70 = vmatpush1.bf16.msra.mxu0 0
    %71 = vmatprep.subr.bf16.mxu0 0
    %72 = vmatpush1.bf16.msra.mxu0 0
    %73 = vmatprep.subr.bf16.mxu0 0
    %74 = vmatpush1.bf16.msra.mxu0 0
    %75 = vmatprep.subr.bf16.mxu0 0
    %76 = vmatpush1.bf16.msra.mxu0 0
    %77 = vmatprep.mubr.bf16.mxu0 0
    %78 = vmatmul.mubr.bf16.gmra.mrb[0].mxu0 %v43
    %v79 = vpop.f32.mrb[0].mxu0
    %v80 = vadd.f32 %v27, %v79
    %v81 = vpop.f32.mrb[0].mxu0
    %v82 = vpop.f32.mrb[0].mxu0
    %v83 = vpop.f32.mrb[0].mxu0
    %84 = vdwg.mxu0
    %vm85 = vcmask 39936
    %86 = vst.msk [vmem:[#allocation2] sm:$0xff] %vm85, %v80
    // Predicated region
    $region14: #{_forward_logits.1} parent=1 // pred_check
      _
    $region15: #{_forward_logits.1} parent=1 // pred_check_branch
      %88 = sbr.rel (0) target = $region17
    $region16: #{_forward_logits.1} parent=1 // pred_region
      %s90 = ssub.s32 128, 128
      %91 = vsyncadd [#allocation3], %s90
      %s93 = sshll.u32 [#allocation2], 4
      %s94 = int_to_ptr.vmem [resolvable:$true] %s93
      %96 = dma.vmem_to_hbm [thread:$0]  %s94, 128, %s3, [#allocation3]
    $region17: #{_forward_logits.1} parent=1 // pred_fallthru
      _
    // Predicated region
    $region18: #{_forward_logits.1} parent=1 // pred_check
      _
    $region19: #{_forward_logits.1} parent=1 // pred_check_branch
      %98 = sbr.rel (0) target = $region21
    $region20: #{_forward_logits.1} parent=1 // pred_region
      %99 = dma.done [#allocation3], 128
    $region21: #{_forward_logits.1} parent=1 // pred_fallthru
      _
    %100 = vsyncpa [#allocation3], 1

</llo_original>
